<compile_context>
chip_gen: v6e
topology: v6e:2x2x1
jax: 0.10.0
libtpu: 0.0.40
codegen_flags: <defaults>
</compile_context>

<pallas_src>
import math
import functools

import jax
import jax.numpy as jnp
from jax.experimental import pallas as pl
from jax.experimental.pallas import tpu as pltpu


def _round_up(x, m):
    return ((x + m - 1) // m) * m


def _vmem_capacity_bytes():
    """Physical per-core VMEM; conservative fallback if the query fails."""
    try:
        info = pltpu.get_tpu_info()
        cap = getattr(info, "vmem_capacity_bytes", None)
        if cap:
            return int(cap)
    except Exception:
        pass
    return 64 * 1024 * 1024  # v7x-sized fallback, safe on every generation


def _fused_footprint(tm, d_pad, h_pad, wsz, xsz, osz):
    """VMEM bytes if W1/W2 are fully resident (double-buffer counted)."""
    return (2 * tm * d_pad * xsz            # x tiles (double-buffered)
            + 2 * tm * d_pad * osz          # out tiles
            + 2 * d_pad * h_pad * wsz       # W1
            + 2 * h_pad * d_pad * wsz       # W2
            + 2 * h_pad * 4 + 2 * d_pad * 4)  # biases (f32)


def _tiled_footprint(tm, th, d_pad, wsz, xsz, osz):
    """VMEM bytes for the hidden-tiled path with an f32 accumulator."""
    return (2 * tm * d_pad * xsz
            + 2 * tm * d_pad * osz
            + tm * d_pad * 4                # f32 accumulator scratch
            + 2 * d_pad * th * wsz          # W1 column tile
            + 2 * th * d_pad * wsz          # W2 row tile
            + 2 * th * 4 + 2 * d_pad * 4)


def _select_tiling(n_rows, d_pad, h_pad, *, tm_request, budget, wsz, xsz, osz,
                   row_granule):
    """Pick (row tile, hidden tile).  hidden tile=None => weights-resident."""
    tm = min(_round_up(tm_request, row_granule), _round_up(n_rows, row_granule))

    def io_bytes(t):
        return 2 * t * d_pad * xsz + 2 * t * d_pad * osz + t * d_pad * 4

    # Keep at least half of the budget available for weight tiles.
    while tm > row_granule and io_bytes(tm) > budget // 2:
        tm = max(row_granule, _round_up(tm // 2, row_granule))

    # Weights-resident fast path: both matrices live in VMEM across the whole
    # row loop (single HBM read of W1/W2 regardless of N).
    if _fused_footprint(tm, d_pad, h_pad, wsz, xsz, osz) <= budget:
        return tm, None

    # Otherwise: largest multiple-of-128 hidden tile that fits the budget.
    th = 128
    while th + 128 <= h_pad and _tiled_footprint(
            tm, th + 128, d_pad, wsz, xsz, osz) <= budget:
        th += 128
    return tm, th


def _gelu(h, approx):
    if approx:
        return jax.nn.gelu(h, approximate=True)      # tanh -> EUP slot
    inv_sqrt2 = jnp.float32(1.0 / math.sqrt(2.0))
    return 0.5 * h * (1.0 + jax.lax.erf(h * inv_sqrt2))  # matches torch GELU()


def _mlp_kernel_fused(x_ref, w1_ref, b1_ref, w2_ref, b2_ref, o_ref,
                      *, approx_gelu):
    """Single-step fused o = gelu(x@W1+b1)@W2 + b2 with resident weights."""
    h = jnp.dot(x_ref[...], w1_ref[...], preferred_element_type=jnp.float32)
    h = _gelu(h + b1_ref[...], approx_gelu)
    out = jnp.dot(h.astype(w2_ref.dtype), w2_ref[...],
                  preferred_element_type=jnp.float32)
    # TODO(synk): nn.Dropout is identity in eval mode / p=0; no RNG mask here.
    o_ref[...] = (out + b2_ref[...]).astype(o_ref.dtype)


def _mlp_kernel_tiled(x_ref, w1_ref, b1_ref, w2_ref, b2_ref, o_ref, acc_ref,
                      *, approx_gelu):
    """Hidden-tiled step: partial fc2 contraction into an f32 accumulator."""
    k = pl.program_id(1)

    @pl.when(k == 0)
    def _():
        acc_ref[...] = jnp.zeros_like(acc_ref)

    h = jnp.dot(x_ref[...], w1_ref[...], preferred_element_type=jnp.float32)
    h = _gelu(h + b1_ref[...], approx_gelu)
    acc_ref[...] += jnp.dot(h.astype(w2_ref.dtype), w2_ref[...],
                            preferred_element_type=jnp.float32)

    @pl.when(k == pl.num_programs(1) - 1)
    def _():
        # TODO(synk): dropout is identity (eval mode / p=0).
        o_ref[...] = (acc_ref[...] + b2_ref[...]).astype(o_ref.dtype)


def prepare_mlp_params(w1, b1, w2, b2, compute_dtype=jnp.bfloat16):
    """Pad to lane-dense multiples of 128 and cast ONCE, outside the hot path."""
    D, H = w1.shape
    d_pad, h_pad = _round_up(D, 128), _round_up(H, 128)
    w1p = jnp.pad(w1.astype(compute_dtype), ((0, d_pad - D), (0, h_pad - H)))
    w2p = jnp.pad(w2.astype(compute_dtype), ((0, h_pad - H), (0, d_pad - D)))
    b1p = jnp.pad(b1.astype(jnp.float32).reshape(1, -1), ((0, 0), (0, h_pad - H)))
    b2p = jnp.pad(b2.astype(jnp.float32).reshape(1, -1), ((0, 0), (0, d_pad - D)))
    return w1p, b1p, w2p, b2p


@functools.partial(
    jax.jit,
    static_argnames=("tm", "approx_gelu", "out_dtype", "vmem_budget_frac"))
def mlp_forward(x, w1p, b1p, w2p, b2p, *,
                tm=512,
                approx_gelu=True,
                out_dtype=None,
                vmem_budget_frac=0.75):
    """x: (B, T, D).  w1p/b1p/w2p/b2p: pre-padded params from prepare_mlp_params."""
    B, T, D = x.shape
    N = B * T
    d_pad, h_pad = w1p.shape
    cdt = w1p.dtype
    out_dtype = x.dtype if out_dtype is None else out_dtype

    wsz = jnp.dtype(cdt).itemsize
    xsz = wsz
    osz = jnp.dtype(out_dtype).itemsize
    row_granule = 16 if wsz <= 2 else 8       # bf16 packs 2 rows / sublane

    budget = int(_vmem_capacity_bytes() * vmem_budget_frac)
    tm_eff, th = _select_tiling(N, d_pad, h_pad, tm_request=tm, budget=budget,
                                wsz=wsz, xsz=xsz, osz=osz,
                                row_granule=row_granule)
    n_pad = _round_up(N, tm_eff)

    # Only the activations are padded/cast per call (weights were done once).
    x2 = jnp.pad(x.reshape(N, D).astype(cdt),
                 ((0, n_pad - N), (0, d_pad - D)))

    if th is None:
        # ---- weights-resident fast path: single grid axis over rows --------
        grid = (n_pad // tm_eff,)
        out = pl.pallas_call(
            functools.partial(_mlp_kernel_fused, approx_gelu=approx_gelu),
            out_shape=jax.ShapeDtypeStruct((n_pad, d_pad), out_dtype),
            grid_spec=pltpu.PrefetchScalarGridSpec(
                num_scalar_prefetch=0,
                grid=grid,
                in_specs=[
                    pl.BlockSpec((tm_eff, d_pad), lambda i: (i, 0)),   # x rows
                    pl.BlockSpec((d_pad, h_pad), lambda i: (0, 0)),    # W1 (resident)
                    pl.BlockSpec((1, h_pad), lambda i: (0, 0)),        # b1
                    pl.BlockSpec((h_pad, d_pad), lambda i: (0, 0)),    # W2 (resident)
                    pl.BlockSpec((1, d_pad), lambda i: (0, 0)),        # b2
                ],
                out_specs=pl.BlockSpec((tm_eff, d_pad), lambda i: (i, 0)),
            ),
            compiler_params=pltpu.CompilerParams(
                dimension_semantics=("parallel",),
                vmem_limit_bytes=budget,
            ),
        )(x2, w1p, b1p, w2p, b2p)
    else:
        # ---- hidden-tiled path (huge H*D only) ------------------------------
        h_work = _round_up(h_pad, th)
        if h_work > h_pad:
            # Rare re-pad so th need not divide h_pad (keeps the MXU slab deep
            # instead of collapsing th to 128).  Only hit in the already
            # HBM-bound regime; the extra bytes are a small fraction of W1/W2.
            w1p = jnp.pad(w1p, ((0, 0), (0, h_work - h_pad)))
            w2p = jnp.pad(w2p, ((0, h_work - h_pad), (0, 0)))
            b1p = jnp.pad(b1p, ((0, 0), (0, h_work - h_pad)))
        grid = (n_pad // tm_eff, h_work // th)
        out = pl.pallas_call(
            functools.partial(_mlp_kernel_tiled, approx_gelu=approx_gelu),
            out_shape=jax.ShapeDtypeStruct((n_pad, d_pad), out_dtype),
            grid_spec=pltpu.PrefetchScalarGridSpec(
                num_scalar_prefetch=0,
                grid=grid,
                in_specs=[
                    pl.BlockSpec((tm_eff, d_pad), lambda i, k: (i, 0)),  # x rows
                    pl.BlockSpec((d_pad, th), lambda i, k: (0, k)),      # W1 cols
                    pl.BlockSpec((1, th), lambda i, k: (0, k)),          # b1 cols
                    pl.BlockSpec((th, d_pad), lambda i, k: (k, 0)),      # W2 rows
                    pl.BlockSpec((1, d_pad), lambda i, k: (0, 0)),       # b2
                ],
                out_specs=pl.BlockSpec((tm_eff, d_pad), lambda i, k: (i, 0)),
                scratch_shapes=[pltpu.VMEM((tm_eff, d_pad), jnp.float32)],
            ),
            compiler_params=pltpu.CompilerParams(
                dimension_semantics=("parallel", "arbitrary"),
                vmem_limit_bytes=budget,
            ),
        )(x2, w1p, b1p, w2p, b2p)

    return out[:N, :D].reshape(B, T, D).astype(out_dtype)


def init_mlp_params(key, h_dim, mlp_ratio):
    """Deterministic init mirroring nn.Linear defaults (uniform +-1/sqrt(fan_in))."""
    hidden = mlp_ratio * h_dim
    k1, k2, k3, k4 = jax.random.split(key, 4)
    lim1 = 1.0 / math.sqrt(h_dim)
    lim2 = 1.0 / math.sqrt(hidden)
    # stored as (in, out) — transpose of torch's (out, in) weight layout
    w1 = jax.random.uniform(k1, (h_dim, hidden), jnp.float32, -lim1, lim1)
    b1 = jax.random.uniform(k2, (hidden,), jnp.float32, -lim1, lim1)
    w2 = jax.random.uniform(k3, (hidden, h_dim), jnp.float32, -lim2, lim2)
    b2 = jax.random.uniform(k4, (h_dim,), jnp.float32, -lim2, lim2)
    return w1, b1, w2, b2


def mlp_reference(x, w1, b1, w2, b2):
    """Pure-JAX f32 reference of the PyTorch forward (eval mode)."""
    h = jnp.dot(x, w1) + b1
    h = 0.5 * h * (1.0 + jax.lax.erf(h / jnp.sqrt(2.0)))
    return jnp.dot(h, w2) + b2


if __name__ == "__main__":
    key = jax.random.PRNGKey(0)
    kx, kp = jax.random.split(key)

    B, T, h_dim, mlp_ratio = 2, 8, 32, 4   # hidden = 128
    x = jax.random.normal(kx, (B, T, h_dim), jnp.float32)
    w1, b1, w2, b2 = init_mlp_params(kp, h_dim, mlp_ratio)

    ref = mlp_reference(x.reshape(-1, h_dim), w1, b1, w2, b2).reshape(B, T, h_dim)

    # Exact path (f32 params, erf GELU) — tight check vs. the reference.
    params_f32 = prepare_mlp_params(w1, b1, w2, b2, compute_dtype=jnp.float32)
    out_f32 = jax.block_until_ready(
        mlp_forward(x, *params_f32, approx_gelu=False))
    assert out_f32.shape == (B, T, h_dim)
    assert jnp.allclose(out_f32, ref, atol=1e-5, rtol=1e-5), "f32 mismatch"

    # Fast path (pre-padded bf16 params, tanh GELU, f32 accumulation) — loose.
    params_bf16 = prepare_mlp_params(w1, b1, w2, b2, compute_dtype=jnp.bfloat16)
    out_bf16 = jax.block_until_ready(mlp_forward(x, *params_bf16))
    assert out_bf16.shape == (B, T, h_dim)
    assert jnp.allclose(out_bf16, ref, atol=5e-2, rtol=5e-2), "bf16 mismatch"

    print("KERNEL_OK")
</pallas_src>

<mosaic_0001>
module attributes {stable_mosaic.version = 11 : i64} {
  func.func @_mlp_kernel_fused(%arg0: i32, %arg1: memref<16x128xf32, #tpu.memory_space<vmem>>, %arg2: memref<128x128xf32, #tpu.memory_space<vmem>>, %arg3: memref<1x128xf32, #tpu.memory_space<vmem>>, %arg4: memref<128x128xf32, #tpu.memory_space<vmem>>, %arg5: memref<1x128xf32, #tpu.memory_space<vmem>>, %arg6: memref<16x128xf32, #tpu.memory_space<vmem>>) attributes {dimension_semantics = [#tpu.dimension_semantics<parallel>], iteration_bounds = array<i64: 1>, scalar_prefetch = 0 : i64, scratch_operands = 0 : i64, tpu.core_type = #tpu.core_type<tc>, window_params = [{transform_indices = @transform_0, window_bounds = array<i64: 16, 128>}, {pipeline_mode = #tpu.pipeline_mode<synchronous>, transform_indices = @transform_1, window_bounds = array<i64: 128, 128>}, {pipeline_mode = #tpu.pipeline_mode<synchronous>, transform_indices = @transform_2, window_bounds = array<i64: 1, 128>}, {pipeline_mode = #tpu.pipeline_mode<synchronous>, transform_indices = @transform_3, window_bounds = array<i64: 128, 128>}, {pipeline_mode = #tpu.pipeline_mode<synchronous>, transform_indices = @transform_4, window_bounds = array<i64: 1, 128>}, {transform_indices = @transform_5, window_bounds = array<i64: 16, 128>}]} {
    %c0 = arith.constant 0 : index
    %c0_0 = arith.constant 0 : index
    %0 = vector.load %arg1[%c0, %c0_0] : memref<16x128xf32, #tpu.memory_space<vmem>>, vector<16x128xf32>
    %c0_1 = arith.constant 0 : index
    %c0_2 = arith.constant 0 : index
    %1 = vector.load %arg2[%c0_1, %c0_2] : memref<128x128xf32, #tpu.memory_space<vmem>>, vector<128x128xf32>
    %cst = arith.constant dense<0.000000e+00> : vector<16x128xf32>
    %2 = tpu.matmul %0, %1, %cst {dimension_numbers = #tpu.dot_dimension_numbers<[1], [0], [0], [1], [0, 0, 1, 1], [], []>} : vector<16x128xf32>, vector<128x128xf32>, vector<16x128xf32> -> vector<16x128xf32>
    %c0_3 = arith.constant 0 : index
    %c0_4 = arith.constant 0 : index
    %3 = vector.load %arg3[%c0_3, %c0_4] : memref<1x128xf32, #tpu.memory_space<vmem>>, vector<1x128xf32>
    %4 = vector.broadcast %3 : vector<1x128xf32> to vector<16x128xf32>
    %5 = arith.addf %2, %4 : vector<16x128xf32>
    %cst_5 = arith.constant 5.000000e-01 : f32
    %6 = vector.broadcast %cst_5 : f32 to vector<16x128xf32>
    %7 = arith.mulf %6, %5 : vector<16x128xf32>
    %cst_6 = arith.constant 0.707106769 : f32
    %8 = vector.broadcast %cst_6 : f32 to vector<16x128xf32>
    %9 = arith.mulf %5, %8 : vector<16x128xf32>
    %10 = math.erf %9 : vector<16x128xf32>
    %cst_7 = arith.constant 1.000000e+00 : f32
    %11 = vector.broadcast %cst_7 : f32 to vector<16x128xf32>
    %12 = arith.addf %11, %10 : vector<16x128xf32>
    %13 = arith.mulf %7, %12 : vector<16x128xf32>
    %c0_8 = arith.constant 0 : index
    %c0_9 = arith.constant 0 : index
    %14 = vector.load %arg4[%c0_8, %c0_9] : memref<128x128xf32, #tpu.memory_space<vmem>>, vector<128x128xf32>
    %cst_10 = arith.constant dense<0.000000e+00> : vector<16x128xf32>
    %15 = tpu.matmul %13, %14, %cst_10 {dimension_numbers = #tpu.dot_dimension_numbers<[1], [0], [0], [1], [0, 0, 1, 1], [], []>} : vector<16x128xf32>, vector<128x128xf32>, vector<16x128xf32> -> vector<16x128xf32>
    %c0_11 = arith.constant 0 : index
    %c0_12 = arith.constant 0 : index
    %16 = vector.load %arg5[%c0_11, %c0_12] : memref<1x128xf32, #tpu.memory_space<vmem>>, vector<1x128xf32>
    %17 = vector.broadcast %16 : vector<1x128xf32> to vector<16x128xf32>
    %18 = arith.addf %15, %17 : vector<16x128xf32>
    %c0_13 = arith.constant 0 : index
    %c0_14 = arith.constant 0 : index
    %19 = vector.load %arg6[%c0_13, %c0_14] : memref<16x128xf32, #tpu.memory_space<vmem>>, vector<16x128xf32>
    tpu.vector_store %arg6[%c0_13, %c0_14], %18 {strides = array<i32>} : memref<16x128xf32, #tpu.memory_space<vmem>>, vector<16x128xf32>,
    return
  }
  func.func @transform_0(%arg0: i32) -> (i32, i32) {
    %c0_i32 = arith.constant 0 : i32
    %c0_i32_0 = arith.constant 0 : i32
    return %arg0, %c0_i32 : i32, i32
  }
  func.func @transform_1(%arg0: i32) -> (i32, i32) {
    %c0_i32 = arith.constant 0 : i32
    %c0_i32_0 = arith.constant 0 : i32
    %c0_i32_1 = arith.constant 0 : i32
    return %c0_i32, %c0_i32_0 : i32, i32
  }
  func.func @transform_2(%arg0: i32) -> (i32, i32) {
    %c0_i32 = arith.constant 0 : i32
    %c0_i32_0 = arith.constant 0 : i32
    %c0_i32_1 = arith.constant 0 : i32
    return %c0_i32, %c0_i32_0 : i32, i32
  }
  func.func @transform_3(%arg0: i32) -> (i32, i32) {
    %c0_i32 = arith.constant 0 : i32
    %c0_i32_0 = arith.constant 0 : i32
    %c0_i32_1 = arith.constant 0 : i32
    return %c0_i32, %c0_i32_0 : i32, i32
  }
  func.func @transform_4(%arg0: i32) -> (i32, i32) {
    %c0_i32 = arith.constant 0 : i32
    %c0_i32_0 = arith.constant 0 : i32
    %c0_i32_1 = arith.constant 0 : i32
    return %c0_i32, %c0_i32_0 : i32, i32
  }
  func.func @transform_5(%arg0: i32) -> (i32, i32) {
    %c0_i32 = arith.constant 0 : i32
    %c0_i32_0 = arith.constant 0 : i32
    return %arg0, %c0_i32 : i32, i32
  }
}

</mosaic_0001>

<llo_original>
// kernel: mlp_forward.1
$region0: #{mlp_forward.1}
  #allocation0 [shape = 'u32[]', space=smem, size = 0x4, offset = 0x4, fixed_abs, tag = 'smem constant byte address 0x4 - core index']
  #allocation1 [shape = 'u32[144,128]{1,0:T(1,128)}', space=vmem, size = 0x12000, scoped, tag = 'internal scratch']
  %s0 = inlined_call_operand.vmem [shape: f32[16,128], index: 0, kind: input, shape index: {}]
  %s1 = inlined_call_operand.hbm [shape: f32[128,128], index: 1, kind: input, shape index: {}]
  %s2 = inlined_call_operand.vmem [shape: f32[1,128], index: 2, kind: input, shape index: {}]
  %s3 = inlined_call_operand.hbm [shape: f32[128,128], index: 3, kind: input, shape index: {}]
  %s4 = inlined_call_operand.vmem [shape: f32[1,128], index: 4, kind: input, shape index: {}]
  %s5 = inlined_call_operand.vmem [shape: f32[16,128], index: 5, kind: output, shape index: {}]
  %s6 = sld [smem:[#allocation0]]
  $region38: #{mlp_forward.1} parent=0
    _
  %s8 = ssub.s32 1, %s6
  %s9 = scalar_select 0, %s8, %s6
  $region1: #{mlp_forward.1} parent=0
    #allocation2 [shape = 'u8[65536]{0}', space=vmem, size = 0x10000, scoped, tag = 'input window, operand 1, single buffered']
    #allocation3 [shape = 's32[1]{0}', space=sflag, size = 0x4, scoped, tag = 'scoped memory for mlp_forward.1']
    #allocation4 [shape = 'u8[65536]{0}', space=vmem, size = 0x10000, scoped, tag = 'input window, operand 3, single buffered']
    #allocation5 [shape = 's32[1]{0}', space=sflag, size = 0x4, scoped, tag = 'scoped memory for mlp_forward.1']
    %10 = vsyncpa [#allocation3], 0
    %11 = vsyncpa [#allocation5], 0
    // Predicated region
    $region2: #{mlp_forward.1} parent=1 // pred_check
      _
    $region3: #{mlp_forward.1} parent=1 // pred_check_branch
      %13 = sbr.rel (0) target = $region5
    $region4: #{mlp_forward.1} parent=1 // pred_region
      _
    $region5: #{mlp_forward.1} parent=1 // pred_fallthru
      _
    // Predicated region
    $region6: #{mlp_forward.1} parent=1 // pred_check
      _
    $region7: #{mlp_forward.1} parent=1 // pred_check_branch
      %15 = sbr.rel (0) target = $region9
    $region8: #{mlp_forward.1} parent=1 // pred_region
      %s17 = ssub.s32 2048, 2048
      %18 = vsyncadd [#allocation3], %s17
      %s19 = sshll.u32 [#allocation2], 4
      %s20 = int_to_ptr.vmem [resolvable:$true] %s19
      %25 = dma.hbm_to_vmem [thread:$0]  %s1, 2048, %s20, [#allocation3], 128, 128, 8
    $region9: #{mlp_forward.1} parent=1 // pred_fallthru
      _
    // Predicated region
    $region10: #{mlp_forward.1} parent=1 // pred_check
      _
    $region11: #{mlp_forward.1} parent=1 // pred_check_branch
      %27 = sbr.rel (0) target = $region13
    $region12: #{mlp_forward.1} parent=1 // pred_region
      _
    $region13: #{mlp_forward.1} parent=1 // pred_fallthru
      _
    // Predicated region
    $region14: #{mlp_forward.1} parent=1 // pred_check
      _
    $region15: #{mlp_forward.1} parent=1 // pred_check_branch
      %29 = sbr.rel (0) target = $region17
    $region16: #{mlp_forward.1} parent=1 // pred_region
      %s31 = ssub.s32 2048, 2048
      %32 = vsyncadd [#allocation5], %s31
      %s33 = sshll.u32 [#allocation4], 4
      %s34 = int_to_ptr.vmem [resolvable:$true] %s33
      %39 = dma.hbm_to_vmem [thread:$0]  %s3, 2048, %s34, [#allocation5], 128, 128, 8
    $region17: #{mlp_forward.1} parent=1 // pred_fallthru
      _
    // Predicated region
    $region18: #{mlp_forward.1} parent=1 // pred_check
      _
    $region19: #{mlp_forward.1} parent=1 // pred_check_branch
      %41 = sbr.rel (0) target = $region21
    $region20: #{mlp_forward.1} parent=1 // pred_region
      _
    $region21: #{mlp_forward.1} parent=1 // pred_fallthru
      _
    // Predicated region
    $region22: #{mlp_forward.1} parent=1 // pred_check
      _
    $region23: #{mlp_forward.1} parent=1 // pred_check_branch
      %43 = sbr.rel (0) target = $region25
    $region24: #{mlp_forward.1} parent=1 // pred_region
      %44 = dma.done [#allocation3], 2048
    $region25: #{mlp_forward.1} parent=1 // pred_fallthru
      _
    // Predicated region
    $region26: #{mlp_forward.1} parent=1 // pred_check
      _
    $region27: #{mlp_forward.1} parent=1 // pred_check_branch
      %46 = sbr.rel (0) target = $region29
    $region28: #{mlp_forward.1} parent=1 // pred_region
      %47 = dma.done [#allocation5], 2048
    $region29: #{mlp_forward.1} parent=1 // pred_fallthru
      _
    %v48 = vld [vmem:[%s0] sm:$0xff]
    %v49 = vld [vmem:[%s0 + $0x8] sm:$0xff]
    %v50 = vld [vmem:[#allocation2] sm:$0xff]
    %v51 = vld [vmem:[#allocation2 + $0x8] sm:$0xff]
    %v52 = vld [vmem:[#allocation2 + $0x10] sm:$0xff]
    %v53 = vld [vmem:[#allocation2 + $0x18] sm:$0xff]
    %v54 = vld [vmem:[#allocation2 + $0x20] sm:$0xff]
    %v55 = vld [vmem:[#allocation2 + $0x28] sm:$0xff]
    %v56 = vld [vmem:[#allocation2 + $0x30] sm:$0xff]
    %v57 = vld [vmem:[#allocation2 + $0x38] sm:$0xff]
    %v58 = vld [vmem:[#allocation2 + $0x40] sm:$0xff]
    %v59 = vld [vmem:[#allocation2 + $0x48] sm:$0xff]
    %v60 = vld [vmem:[#allocation2 + $0x50] sm:$0xff]
    %v61 = vld [vmem:[#allocation2 + $0x58] sm:$0xff]
    %v62 = vld [vmem:[#allocation2 + $0x60] sm:$0xff]
    %v63 = vld [vmem:[#allocation2 + $0x68] sm:$0xff]
    %v64 = vld [vmem:[#allocation2 + $0x70] sm:$0xff]
    %v65 = vld [vmem:[#allocation2 + $0x78] sm:$0xff]
    %v66 = vld [vmem:[%s2] sm:$0x1]
    %v68 = vlaneseq
    %v69 = vshrl.u32 %v68, 7
    %v70 = vsub.s32 0, %v69
    %v71 = vrot.slane %v66, %v70
    %73 = vmatprep.subr.mxu0 0.0
    %74 = vmatpush1.msra.mxu0 %v65
    %75 = vmatprep.subr.mxu0 0.0
    %76 = vmatpush1.msra.mxu0 %v64
    %77 = vmatprep.subr.mxu0 0.0
    %78 = vmatpush1.msra.mxu0 %v63
    %79 = vmatprep.subr.mxu0 0.0
    %80 = vmatpush1.msra.mxu0 %v62
    %81 = vmatprep.subr.mxu0 0.0
    %82 = vmatpush1.msra.mxu0 %v61
    %83 = vmatprep.subr.mxu0 0.0
    %84 = vmatpush1.msra.mxu0 %v60
    %85 = vmatprep.subr.mxu0 0.0
    %86 = vmatpush1.msra.mxu0 %v59
    %87 = vmatprep.subr.mxu0 0.0
    %88 = vmatpush1.msra.mxu0 %v58
    %89 = vmatprep.subr.mxu0 0.0
    %90 = vmatpush1.msra.mxu0 %v57
    %91 = vmatprep.subr.mxu0 0.0
    %92 = vmatpush1.msra.mxu0 %v56
    %93 = vmatprep.subr.mxu0 0.0
    %94 = vmatpush1.msra.mxu0 %v55
    %95 = vmatprep.subr.mxu0 0.0
    %96 = vmatpush1.msra.mxu0 %v54
    %97 = vmatprep.subr.mxu0 0.0
    %98 = vmatpush1.msra.mxu0 %v53
    %99 = vmatprep.subr.mxu0 0.0
    %100 = vmatpush1.msra.mxu0 %v52
    %101 = vmatprep.subr.mxu0 0.0
    %102 = vmatpush1.msra.mxu0 %v51
    %103 = vmatprep.subr.mxu0 0.0
    %104 = vmatpush1.msra.mxu0 %v50
    %105 = vmatprep.subr.mxu0 0.0
    %106 = vmatpush2.msra.mxu0 0.0
    %107 = vmatprep.subr.mxu0 0.0
    %108 = vmatpush2.msra.mxu0 0.0
    %109 = vmatprep.subr.mxu0 0.0
    %110 = vmatpush2.msra.mxu0 0.0
    %111 = vmatprep.subr.mxu0 0.0
    %112 = vmatpush2.msra.mxu0 0.0
    %113 = vmatprep.subr.mxu0 0.0
    %114 = vmatpush2.msra.mxu0 0.0
    %115 = vmatprep.subr.mxu0 0.0
    %116 = vmatpush2.msra.mxu0 0.0
    %117 = vmatprep.subr.mxu0 0.0
    %118 = vmatpush2.msra.mxu0 0.0
    %119 = vmatprep.subr.mxu0 0.0
    %120 = vmatpush2.msra.mxu0 0.0
    %121 = vmatprep.subr.mxu0 0.0
    %122 = vmatpush2.msra.mxu0 0.0
    %123 = vmatprep.subr.mxu0 0.0
    %124 = vmatpush2.msra.mxu0 0.0
    %125 = vmatprep.subr.mxu0 0.0
    %126 = vmatpush2.msra.mxu0 0.0
    %127 = vmatprep.subr.mxu0 0.0
    %128 = vmatpush2.msra.mxu0 0.0
    %129 = vmatprep.subr.mxu0 0.0
    %130 = vmatpush2.msra.mxu0 0.0
    %131 = vmatprep.subr.mxu0 0.0
    %132 = vmatpush2.msra.mxu0 0.0
    %133 = vmatprep.subr.mxu0 0.0
    %134 = vmatpush2.msra.mxu0 0.0
    %135 = vmatprep.subr.mxu0 0.0
    %136 = vmatpush2.msra.mxu0 0.0
    %137 = vmatprep.mubr.f32.mxu0 0.0
    %138 = vmatmul.mubr.f32.gmra.mxu0 %v48
    %v139 = vpop.f32.mrf.mxu0
    %v140 = vadd.f32 %v71, %v139
    %v141 = vpop.f32.mrf.mxu0
    %142 = vmatprep.mubr.f32.mxu0 0.0
    %143 = vmatmul.mubr.f32.gmra.mxu0 %v49
    %v144 = vpop.f32.mrf.mxu0
    %v145 = vadd.f32 %v71, %v144
    %v146 = vpop.f32.mrf.mxu0
    %147 = vdwg.mxu0
    %v148 = vmul.f32 %v140, 0.5
    %v149 = vmul.f32 %v145, 0.5
    %v150 = vmul.f32 %v140, 0.70710677
    %v151 = vmul.f32 %v145, 0.70710677
    %v152 = verf.f32.pop %v150
    %v153 = verf.f32.pop %v151
    %v154 = vadd.f32 %v152, 1.0
    %v155 = vadd.f32 %v153, 1.0
    %v156 = vmul.f32 %v148, %v154
    %v157 = vmul.f32 %v149, %v155
    %v158 = vld [vmem:[#allocation4] sm:$0xff]
    %v159 = vld [vmem:[#allocation4 + $0x8] sm:$0xff]
    %v160 = vld [vmem:[#allocation4 + $0x10] sm:$0xff]
    %v161 = vld [vmem:[#allocation4 + $0x18] sm:$0xff]
    %v162 = vld [vmem:[#allocation4 + $0x20] sm:$0xff]
    %v163 = vld [vmem:[#allocation4 + $0x28] sm:$0xff]
    %v164 = vld [vmem:[#allocation4 + $0x30] sm:$0xff]
    %v165 = vld [vmem:[#allocation4 + $0x38] sm:$0xff]
    %v166 = vld [vmem:[#allocation4 + $0x40] sm:$0xff]
    %v167 = vld [vmem:[#allocation4 + $0x48] sm:$0xff]
    %v168 = vld [vmem:[#allocation4 + $0x50] sm:$0xff]
    %v169 = vld [vmem:[#allocation4 + $0x58] sm:$0xff]
    %v170 = vld [vmem:[#allocation4 + $0x60] sm:$0xff]
    %v171 = vld [vmem:[#allocation4 + $0x68] sm:$0xff]
    %v172 = vld [vmem:[#allocation4 + $0x70] sm:$0xff]
    %v173 = vld [vmem:[#allocation4 + $0x78] sm:$0xff]
    %v174 = vld [vmem:[%s4] sm:$0x1]
    %v176 = vlaneseq
    %v177 = vshrl.u32 %v176, 7
    %v178 = vsub.s32 0, %v177
    %v179 = vrot.slane %v174, %v178
    %181 = vmatprep.subr.mxu0 0.0
    %182 = vmatpush1.msra.mxu0 %v173
    %183 = vmatprep.subr.mxu0 0.0
    %184 = vmatpush1.msra.mxu0 %v172
    %185 = vmatprep.subr.mxu0 0.0
    %186 = vmatpush1.msra.mxu0 %v171
    %187 = vmatprep.subr.mxu0 0.0
    %188 = vmatpush1.msra.mxu0 %v170
    %189 = vmatprep.subr.mxu0 0.0
    %190 = vmatpush1.msra.mxu0 %v169
    %191 = vmatprep.subr.mxu0 0.0
    %192 = vmatpush1.msra.mxu0 %v168
    %193 = vmatprep.subr.mxu0 0.0
    %194 = vmatpush1.msra.mxu0 %v167
    %195 = vmatprep.subr.mxu0 0.0
    %196 = vmatpush1.msra.mxu0 %v166
    %197 = vmatprep.subr.mxu0 0.0
    %198 = vmatpush1.msra.mxu0 %v165
    %199 = vmatprep.subr.mxu0 0.0
    %200 = vmatpush1.msra.mxu0 %v164
    %201 = vmatprep.subr.mxu0 0.0
    %202 = vmatpush1.msra.mxu0 %v163
    %203 = vmatprep.subr.mxu0 0.0
    %204 = vmatpush1.msra.mxu0 %v162
    %205 = vmatprep.subr.mxu0 0.0
    %206 = vmatpush1.msra.mxu0 %v161
    %207 = vmatprep.subr.mxu0 0.0
    %208 = vmatpush1.msra.mxu0 %v160
    %209 = vmatprep.subr.mxu0 0.0
    %210 = vmatpush1.msra.mxu0 %v159
    %211 = vmatprep.subr.mxu0 0.0
    %212 = vmatpush1.msra.mxu0 %v158
    %213 = vmatprep.subr.mxu0 0.0
    %214 = vmatpush2.msra.mxu0 0.0
    %215 = vmatprep.subr.mxu0 0.0
    %216 = vmatpush2.msra.mxu0 0.0
    %217 = vmatprep.subr.mxu0 0.0
    %218 = vmatpush2.msra.mxu0 0.0
    %219 = vmatprep.subr.mxu0 0.0
    %220 = vmatpush2.msra.mxu0 0.0
    %221 = vmatprep.subr.mxu0 0.0
    %222 = vmatpush2.msra.mxu0 0.0
    %223 = vmatprep.subr.mxu0 0.0
    %224 = vmatpush2.msra.mxu0 0.0
    %225 = vmatprep.subr.mxu0 0.0
    %226 = vmatpush2.msra.mxu0 0.0
    %227 = vmatprep.subr.mxu0 0.0
    %228 = vmatpush2.msra.mxu0 0.0
    %229 = vmatprep.subr.mxu0 0.0
    %230 = vmatpush2.msra.mxu0 0.0
    %231 = vmatprep.subr.mxu0 0.0
    %232 = vmatpush2.msra.mxu0 0.0
    %233 = vmatprep.subr.mxu0 0.0
    %234 = vmatpush2.msra.mxu0 0.0
    %235 = vmatprep.subr.mxu0 0.0
    %236 = vmatpush2.msra.mxu0 0.0
    %237 = vmatprep.subr.mxu0 0.0
    %238 = vmatpush2.msra.mxu0 0.0
    %239 = vmatprep.subr.mxu0 0.0
    %240 = vmatpush2.msra.mxu0 0.0
    %241 = vmatprep.subr.mxu0 0.0
    %242 = vmatpush2.msra.mxu0 0.0
    %243 = vmatprep.subr.mxu0 0.0
    %244 = vmatpush2.msra.mxu0 0.0
    %245 = vmatprep.mubr.f32.mxu0 0.0
    %246 = vmatmul.mubr.f32.gmra.mxu0 %v156
    %v247 = vpop.f32.mrf.mxu0
    %v248 = vadd.f32 %v179, %v247
    %v249 = vpop.f32.mrf.mxu0
    %250 = vmatprep.mubr.f32.mxu0 0.0
    %251 = vmatmul.mubr.f32.gmra.mxu0 %v157
    %v252 = vpop.f32.mrf.mxu0
    %v253 = vadd.f32 %v179, %v252
    %v254 = vpop.f32.mrf.mxu0
    %255 = vdwg.mxu0
    %256 = vst [vmem:[%s5] sm:$0xff] %v248
    %257 = vst [vmem:[%s5 + $0x8] sm:$0xff] %v253
    // Predicated region
    $region30: #{mlp_forward.1} parent=1 // pred_check
      _
    $region31: #{mlp_forward.1} parent=1 // pred_check_branch
      %259 = sbr.rel (0) target = $region33
    $region32: #{mlp_forward.1} parent=1 // pred_region
      _
    $region33: #{mlp_forward.1} parent=1 // pred_fallthru
      _
    // Predicated region
    $region34: #{mlp_forward.1} parent=1 // pred_check
      _
    $region35: #{mlp_forward.1} parent=1 // pred_check_branch
      %261 = sbr.rel (0) target = $region37
    $region36: #{mlp_forward.1} parent=1 // pred_region
      _
    $region37: #{mlp_forward.1} parent=1 // pred_fallthru
      _
    %262 = vsyncpa [#allocation3], 1
    %263 = vsyncpa [#allocation5], 1

</llo_original>
